<compile_context>
chip_gen: v6e
topology: v6e:2x2x1
jax: 0.10.0
libtpu: 0.0.40
codegen_flags: <defaults>
</compile_context>

<pallas_src>
import functools

import numpy as np
import jax
import jax.numpy as jnp
from jax.experimental import pallas as pl
from jax.experimental.pallas import tpu as pltpu


def _round_up(x, m):
    return ((x + m - 1) // m) * m


# ---------------------------------------------------------------------------
# Host-side constant matrices.
# ---------------------------------------------------------------------------
def _windowed_dft_matrix(n_fft, nf_pad):
    """(n_fft, 2*nf_pad): [diag(hann)@cos | diag(hann)@(-sin)], zero-padded columns."""
    n_freq = n_fft // 2 + 1
    n = np.arange(n_fft)
    win = 0.5 - 0.5 * np.cos(2.0 * np.pi * n / n_fft)           # periodic hann
    ang = 2.0 * np.pi * n[:, None] * np.arange(n_freq)[None, :] / n_fft
    cos_m = np.cos(ang) * win[:, None]       # real part of exp(-i*ang), window folded in
    sin_m = -np.sin(ang) * win[:, None]      # imag part of exp(-i*ang), window folded in
    out = np.zeros((n_fft, 2 * nf_pad), np.float32)
    out[:, :n_freq] = cos_m
    out[:, nf_pad:nf_pad + n_freq] = sin_m
    return out


def _mel_fbanks(n_freq, nf_pad, f_min, f_max, n_mels, sample_rate):
    """torchaudio melscale_fbanks (mel_scale='htk', norm=None); rows zero-padded."""
    all_freqs = np.linspace(0.0, sample_rate // 2, n_freq)
    m_min = 2595.0 * np.log10(1.0 + f_min / 700.0)
    m_max = 2595.0 * np.log10(1.0 + f_max / 700.0)
    m_pts = np.linspace(m_min, m_max, n_mels + 2)
    f_pts = 700.0 * (10.0 ** (m_pts / 2595.0) - 1.0)
    f_diff = f_pts[1:] - f_pts[:-1]
    slopes = f_pts[None, :] - all_freqs[:, None]                 # (n_freq, n_mels+2)
    down = -slopes[:, :-2] / f_diff[:-1]
    up = slopes[:, 2:] / f_diff[1:]
    fb = np.maximum(0.0, np.minimum(down, up))
    out = np.zeros((nf_pad, n_mels), np.float32)
    out[:n_freq, :] = fb
    return out


# ---------------------------------------------------------------------------
# Pallas kernel: one tile of frames -> fused windowed DFT (1 MXU matmul) ->
# complex power -> mel matmul -> dB (no top_db clamp here; done in the wrapper).
# ---------------------------------------------------------------------------
def _mel_db_kernel(frames_ref, dft_ref, fb_ref, out_ref, *, nf_pad):
    # (TILE_M, n_fft) @ (n_fft, 2*nf_pad): re | im in one MXU pass (LHS pushed once).
    spec = jnp.dot(frames_ref[...], dft_ref[...], preferred_element_type=jnp.float32)
    re = spec[:, :nf_pad]                      # lane-aligned static slices
    im = spec[:, nf_pad:]
    power = re * re
    power = power + im * im                    # ComplexNorm(power=2.0)
    mel = jnp.dot(power, fb_ref[...], preferred_element_type=jnp.float32)
    # AmplitudeToDB (stype="power", ref=1.0, amin=1e-10); top_db clamp applied outside.
    out_ref[...] = 10.0 * jnp.log10(jnp.maximum(mel, 1e-10))


# ---------------------------------------------------------------------------
# Wrapper == RondomStretchMelSpectrogram.forward(x, train=False)
# ---------------------------------------------------------------------------
def random_stretch_mel_spectrogram(x, *, sample_rate, n_fft, top_db, max_perc,
                                   f_max=8000.0, train=False,
                                   tile_m=256, use_bf16_matmul=False):
    # TODO(synk): train=True path (TimeStretch phase vocoder with random Uniform rate)
    # is not implemented; only the deterministic eval path is reproduced.
    del max_perc
    assert not train, "only train=False path implemented"

    B, C, L = x.shape
    hop = n_fft // 2
    n_freq = n_fft // 2 + 1
    n_mels = 128                                   # torchaudio MelSpectrogram default
    nf_pad = _round_up(n_freq, 128)                # 129 -> 256 (lane aligned)

    # --- Spectrogram(center=True) reflect padding + framing (glue, plain JAX). ---
    # TODO(synk): framing could be moved in-kernel (overlapping pl.ds reads off the
    # padded waveform) to cut HBM input traffic ~2x if profiling shows HBM-bound.
    pad = n_fft // 2
    xp = jnp.pad(x.astype(jnp.float32), ((0, 0), (0, 0), (pad, pad)), mode="reflect")
    n_frames = 1 + (xp.shape[-1] - n_fft) // hop
    idx = np.arange(n_frames)[:, None] * hop + np.arange(n_fft)[None, :]
    frames = xp[:, :, idx].reshape(B * C * n_frames, n_fft)      # (M, n_fft)

    # Pad M so every tile is full (padded rows are zeros -> -100 dB, sliced off later).
    M = B * C * n_frames
    tile = min(tile_m, _round_up(M, 128))
    M_pad = _round_up(M, tile)
    if M_pad > M:
        frames = jnp.concatenate(
            [frames, jnp.zeros((M_pad - M, n_fft), frames.dtype)], axis=0)

    # Constant matrices (window folded into DFT; cos|sin fused; freq dim zero-padded).
    dft_np = _windowed_dft_matrix(n_fft, nf_pad)
    fb = jnp.asarray(_mel_fbanks(n_freq, nf_pad, 0.0, float(f_max), n_mels, sample_rate))

    if use_bf16_matmul:
        # bf16 MXU inputs (full-rate on v6e/v7x); accumulation stays f32.
        frames_in = frames.astype(jnp.bfloat16)
        dft = jnp.asarray(dft_np, dtype=jnp.bfloat16)
    else:
        frames_in = frames
        dft = jnp.asarray(dft_np)

    grid = (M_pad // tile,)
    itemsize = jnp.dtype(frames_in.dtype).itemsize
    cost = pl.CostEstimate(
        flops=2 * M_pad * n_fft * (2 * nf_pad)       # fused DFT matmul
        + 2 * M_pad * nf_pad * n_mels                # mel matmul
        + 3 * M_pad * nf_pad,                        # power
        transcendentals=M_pad * n_mels,              # log10
        bytes_accessed=M_pad * n_fft * itemsize      # frames in
        + n_fft * 2 * nf_pad * itemsize              # DFT basis
        + nf_pad * n_mels * 4                        # mel fb
        + M_pad * n_mels * 4,                        # out
    )

    kernel = functools.partial(_mel_db_kernel, nf_pad=nf_pad)
    mel_db = pl.pallas_call(
        kernel,
        out_shape=jax.ShapeDtypeStruct((M_pad, n_mels), jnp.float32),
        grid_spec=pltpu.PrefetchScalarGridSpec(
            num_scalar_prefetch=0,
            grid=grid,
            in_specs=[
                pl.BlockSpec((tile, n_fft), lambda i: (i, 0)),        # frame tile
                pl.BlockSpec((n_fft, 2 * nf_pad), lambda i: (0, 0)),  # resident DFT
                pl.BlockSpec((nf_pad, n_mels), lambda i: (0, 0)),     # resident mel fb
            ],
            out_specs=pl.BlockSpec((tile, n_mels), lambda i: (i, 0)),
        ),
        compiler_params=pltpu.CompilerParams(
            dimension_semantics=("parallel",),         # shard tiles across TCs (v7x)
            vmem_limit_bytes=32 * 1024 * 1024,         # safe on v5e/v6e/v7x
        ),
        cost_estimate=cost,
    )(frames_in, dft, fb)

    # Back to PyTorch layout (B, C, n_mels, time); drop M padding first.
    mel_db = mel_db[:M].reshape(B, C, n_frames, n_mels).transpose(0, 1, 3, 2)

    # top_db clamp vs. per-batch-item max (torchaudio amplitude_to_DB semantics),
    # applied BEFORE the time pad/truncate, as in the PyTorch module.
    ref_max = jnp.max(mel_db, axis=(1, 2, 3), keepdims=True)
    mel_db = jnp.maximum(mel_db, ref_max - float(top_db))

    # Pad / truncate time axis to 157 (zeros, unclamped, matching torch.cat of zeros).
    T = mel_db.shape[3]
    if T > 157:
        out = mel_db[:, :, :, :157]
    else:
        out = jnp.concatenate(
            [mel_db, jnp.zeros((B, C, n_mels, 157 - T), jnp.float32)], axis=3)
    return out


if __name__ == "__main__":
    key = jax.random.PRNGKey(0)
    B, C, L = 2, 1, 1024            # small waveform input (batch, channel, samples)
    x = jax.random.normal(key, (B, C, L), dtype=jnp.float32)

    y = random_stretch_mel_spectrogram(
        x, sample_rate=16000, n_fft=256, top_db=80.0, max_perc=0.2, train=False)
    y = jax.block_until_ready(y)

    assert y.shape == (B, C, 128, 157), y.shape
    assert y.dtype == jnp.float32
    assert bool(jnp.all(jnp.isfinite(y)))
    print("KERNEL_OK")
</pallas_src>

<mosaic_0001>
module attributes {stable_mosaic.version = 11 : i64} {
  func.func @_mel_db_kernel(%arg0: i32, %arg1: memref<128x256xf32, #tpu.memory_space<vmem>>, %arg2: memref<256x512xf32, #tpu.memory_space<vmem>>, %arg3: memref<256x128xf32, #tpu.memory_space<vmem>>, %arg4: memref<128x128xf32, #tpu.memory_space<vmem>>) attributes {dimension_semantics = [#tpu.dimension_semantics<parallel>], iteration_bounds = array<i64: 1>, scalar_prefetch = 0 : i64, scratch_operands = 0 : i64, tpu.core_type = #tpu.core_type<tc>, window_params = [{transform_indices = @transform_0, window_bounds = array<i64: 128, 256>}, {pipeline_mode = #tpu.pipeline_mode<synchronous>, transform_indices = @transform_1, window_bounds = array<i64: 256, 512>}, {pipeline_mode = #tpu.pipeline_mode<synchronous>, transform_indices = @transform_2, window_bounds = array<i64: 256, 128>}, {transform_indices = @transform_3, window_bounds = array<i64: 128, 128>}]} {
    %c0 = arith.constant 0 : index
    %c0_0 = arith.constant 0 : index
    %0 = vector.load %arg1[%c0, %c0_0] : memref<128x256xf32, #tpu.memory_space<vmem>>, vector<128x256xf32>
    %c0_1 = arith.constant 0 : index
    %c0_2 = arith.constant 0 : index
    %1 = vector.load %arg2[%c0_1, %c0_2] : memref<256x512xf32, #tpu.memory_space<vmem>>, vector<256x512xf32>
    %cst = arith.constant dense<0.000000e+00> : vector<128x512xf32>
    %2 = tpu.matmul %0, %1, %cst {dimension_numbers = #tpu.dot_dimension_numbers<[1], [0], [0], [1], [0, 0, 1, 1], [], []>} : vector<128x256xf32>, vector<256x512xf32>, vector<128x512xf32> -> vector<128x512xf32>
    %3 = vector.extract_strided_slice %2 {offsets = [0, 0], sizes = [128, 256], strides = [1, 1]} : vector<128x512xf32> to vector<128x256xf32>
    %4 = vector.extract_strided_slice %2 {offsets = [0, 256], sizes = [128, 256], strides = [1, 1]} : vector<128x512xf32> to vector<128x256xf32>
    %5 = arith.mulf %3, %3 : vector<128x256xf32>
    %6 = arith.mulf %4, %4 : vector<128x256xf32>
    %7 = arith.addf %5, %6 : vector<128x256xf32>
    %c0_3 = arith.constant 0 : index
    %c0_4 = arith.constant 0 : index
    %8 = vector.load %arg3[%c0_3, %c0_4] : memref<256x128xf32, #tpu.memory_space<vmem>>, vector<256x128xf32>
    %cst_5 = arith.constant dense<0.000000e+00> : vector<128x128xf32>
    %9 = tpu.matmul %7, %8, %cst_5 {dimension_numbers = #tpu.dot_dimension_numbers<[1], [0], [0], [1], [0, 0, 1, 1], [], []>} : vector<128x256xf32>, vector<256x128xf32>, vector<128x128xf32> -> vector<128x128xf32>
    %cst_6 = arith.constant 1.000000e-10 : f32
    %10 = vector.broadcast %cst_6 : f32 to vector<128x128xf32>
    %11 = arith.maximumf %9, %10 : vector<128x128xf32>
    %12 = math.log %11 : vector<128x128xf32>
    %cst_7 = arith.constant 0.434294492 : f32
    %13 = vector.broadcast %cst_7 : f32 to vector<128x128xf32>
    %14 = arith.mulf %12, %13 : vector<128x128xf32>
    %cst_8 = arith.constant 1.000000e+01 : f32
    %15 = vector.broadcast %cst_8 : f32 to vector<128x128xf32>
    %16 = arith.mulf %15, %14 : vector<128x128xf32>
    %c0_9 = arith.constant 0 : index
    %c0_10 = arith.constant 0 : index
    %17 = vector.load %arg4[%c0_9, %c0_10] : memref<128x128xf32, #tpu.memory_space<vmem>>, vector<128x128xf32>
    tpu.vector_store %arg4[%c0_9, %c0_10], %16 {strides = array<i32>} : memref<128x128xf32, #tpu.memory_space<vmem>>, vector<128x128xf32>,
    return
  }
  func.func @transform_0(%arg0: i32) -> (i32, i32) {
    %c0_i32 = arith.constant 0 : i32
    %c0_i32_0 = arith.constant 0 : i32
    return %arg0, %c0_i32 : i32, i32
  }
  func.func @transform_1(%arg0: i32) -> (i32, i32) {
    %c0_i32 = arith.constant 0 : i32
    %c0_i32_0 = arith.constant 0 : i32
    %c0_i32_1 = arith.constant 0 : i32
    return %c0_i32, %c0_i32_0 : i32, i32
  }
  func.func @transform_2(%arg0: i32) -> (i32, i32) {
    %c0_i32 = arith.constant 0 : i32
    %c0_i32_0 = arith.constant 0 : i32
    %c0_i32_1 = arith.constant 0 : i32
    return %c0_i32, %c0_i32_0 : i32, i32
  }
  func.func @transform_3(%arg0: i32) -> (i32, i32) {
    %c0_i32 = arith.constant 0 : i32
    %c0_i32_0 = arith.constant 0 : i32
    return %arg0, %c0_i32 : i32, i32
  }
}

</mosaic_0001>

<llo_original>
// kernel: tpu_custom_call.1
$region0: #{tpu_custom_call.1}
  #allocation0 [shape = 'u32[]', space=smem, size = 0x4, offset = 0x4, fixed_abs, tag = 'smem constant byte address 0x4 - core index']
  #allocation1 [shape = 'u32[144,128]{1,0:T(1,128)}', space=vmem, size = 0x12000, scoped, tag = 'internal scratch']
  %s0 = inlined_call_operand.hbm [shape: f32[128,256], index: 0, kind: input, shape index: {}]
  %s1 = inlined_call_operand.hbm [shape: f32[256,512], index: 1, kind: input, shape index: {}]
  %s2 = inlined_call_operand.hbm [shape: f32[256,128], index: 2, kind: input, shape index: {}]
  %s3 = inlined_call_operand.hbm [shape: f32[128,128], index: 3, kind: output, shape index: {}]
  %s4 = sld [smem:[#allocation0]]
  $region34: #{tpu_custom_call.1} parent=0
    _
  %s6 = ssub.s32 1, %s4
  %s7 = scalar_select 0, %s6, %s4
  $region1: #{tpu_custom_call.1} parent=0
    #allocation2 [shape = 'u8[131072]{0}', space=vmem, size = 0x20000, scoped, tag = 'input window, operand 0, single buffered']
    #allocation3 [shape = 's32[1]{0}', space=sflag, size = 0x4, scoped, tag = 'scoped memory for tpu_custom_call.1']
    #allocation4 [shape = 's32[1]{0}', space=sflag, size = 0x4, scoped, tag = 'scoped memory for tpu_custom_call.1']
    #allocation5 [shape = 'u8[524288]{0}', space=vmem, size = 0x80000, scoped, tag = 'input window, operand 1, single buffered']
    #allocation6 [shape = 's32[1]{0}', space=sflag, size = 0x4, scoped, tag = 'scoped memory for tpu_custom_call.1']
    #allocation7 [shape = 'u8[131072]{0}', space=vmem, size = 0x20000, scoped, tag = 'input window, operand 2, single buffered']
    #allocation8 [shape = 'u8[65536]{0}', space=vmem, size = 0x10000, scoped, tag = 'output window, operand 0, single buffered']
    %8 = vsyncpa [#allocation3], 0
    %9 = vsyncpa [#allocation6], 0
    %10 = vsyncpa [#allocation4], 0
    // Predicated region
    $region2: #{tpu_custom_call.1} parent=1 // pred_check
      _
    $region3: #{tpu_custom_call.1} parent=1 // pred_check_branch
      %12 = sbr.rel (0) target = $region5
    $region4: #{tpu_custom_call.1} parent=1 // pred_region
      %s14 = ssub.s32 4096, 4096
      %15 = vsyncadd [#allocation3], %s14
      %s16 = sshll.u32 [#allocation2], 4
      %s17 = int_to_ptr.vmem [resolvable:$true] %s16
      %22 = dma.hbm_to_vmem [thread:$0]  %s0, 4096, %s17, [#allocation3], 256, 256, 16
    $region5: #{tpu_custom_call.1} parent=1 // pred_fallthru
      _
    // Predicated region
    $region6: #{tpu_custom_call.1} parent=1 // pred_check
      _
    $region7: #{tpu_custom_call.1} parent=1 // pred_check_branch
      %24 = sbr.rel (0) target = $region9
    $region8: #{tpu_custom_call.1} parent=1 // pred_region
      %s26 = ssub.s32 16384, 16384
      %27 = vsyncadd [#allocation6], %s26
      %s28 = sshll.u32 [#allocation5], 4
      %s29 = int_to_ptr.vmem [resolvable:$true] %s28
      %34 = dma.hbm_to_vmem [thread:$0]  %s1, 16384, %s29, [#allocation6], 512, 512, 32
    $region9: #{tpu_custom_call.1} parent=1 // pred_fallthru
      _
    // Predicated region
    $region10: #{tpu_custom_call.1} parent=1 // pred_check
      _
    $region11: #{tpu_custom_call.1} parent=1 // pred_check_branch
      %36 = sbr.rel (0) target = $region13
    $region12: #{tpu_custom_call.1} parent=1 // pred_region
      %s38 = ssub.s32 4096, 4096
      %39 = vsyncadd [#allocation6], %s38
      %s40 = sshll.u32 [#allocation7], 4
      %s41 = int_to_ptr.vmem [resolvable:$true] %s40
      %46 = dma.hbm_to_vmem [thread:$0]  %s2, 4096, %s41, [#allocation6], 128, 128, 8
    $region13: #{tpu_custom_call.1} parent=1 // pred_fallthru
      _
    // Predicated region
    $region14: #{tpu_custom_call.1} parent=1 // pred_check
      _
    $region15: #{tpu_custom_call.1} parent=1 // pred_check_branch
      %48 = sbr.rel (0) target = $region17
    $region16: #{tpu_custom_call.1} parent=1 // pred_region
      %49 = dma.done [#allocation3], 4096
    $region17: #{tpu_custom_call.1} parent=1 // pred_fallthru
      _
    // Predicated region
    $region18: #{tpu_custom_call.1} parent=1 // pred_check
      _
    $region19: #{tpu_custom_call.1} parent=1 // pred_check_branch
      %51 = sbr.rel (0) target = $region21
    $region20: #{tpu_custom_call.1} parent=1 // pred_region
      %52 = dma.done [#allocation6], 16384
    $region21: #{tpu_custom_call.1} parent=1 // pred_fallthru
      _
    // Predicated region
    $region22: #{tpu_custom_call.1} parent=1 // pred_check
      _
    $region23: #{tpu_custom_call.1} parent=1 // pred_check_branch
      %54 = sbr.rel (0) target = $region25
    $region24: #{tpu_custom_call.1} parent=1 // pred_region
      %55 = dma.done [#allocation6], 4096
    $region25: #{tpu_custom_call.1} parent=1 // pred_fallthru
      _
    %v56 = vld [vmem:[#allocation2] sm:$0xff]
    %v57 = vld [vmem:[#allocation2 + $0x8] sm:$0xff]
    %v58 = vld [vmem:[#allocation2 + $0x10] sm:$0xff]
    %v59 = vld [vmem:[#allocation2 + $0x18] sm:$0xff]
    %v60 = vld [vmem:[#allocation2 + $0x20] sm:$0xff]
    %v61 = vld [vmem:[#allocation2 + $0x28] sm:$0xff]
    %v62 = vld [vmem:[#allocation2 + $0x30] sm:$0xff]
    %v63 = vld [vmem:[#allocation2 + $0x38] sm:$0xff]
    %v64 = vld [vmem:[#allocation2 + $0x40] sm:$0xff]
    %v65 = vld [vmem:[#allocation2 + $0x48] sm:$0xff]
    %v66 = vld [vmem:[#allocation2 + $0x50] sm:$0xff]
    %v67 = vld [vmem:[#allocation2 + $0x58] sm:$0xff]
    %v68 = vld [vmem:[#allocation2 + $0x60] sm:$0xff]
    %v69 = vld [vmem:[#allocation2 + $0x68] sm:$0xff]
    %v70 = vld [vmem:[#allocation2 + $0x70] sm:$0xff]
    %v71 = vld [vmem:[#allocation2 + $0x78] sm:$0xff]
    %v72 = vld [vmem:[#allocation2 + $0x80] sm:$0xff]
    %v73 = vld [vmem:[#allocation2 + $0x88] sm:$0xff]
    %v74 = vld [vmem:[#allocation2 + $0x90] sm:$0xff]
    %v75 = vld [vmem:[#allocation2 + $0x98] sm:$0xff]
    %v76 = vld [vmem:[#allocation2 + $0xa0] sm:$0xff]
    %v77 = vld [vmem:[#allocation2 + $0xa8] sm:$0xff]
    %v78 = vld [vmem:[#allocation2 + $0xb0] sm:$0xff]
    %v79 = vld [vmem:[#allocation2 + $0xb8] sm:$0xff]
    %v80 = vld [vmem:[#allocation2 + $0xc0] sm:$0xff]
    %v81 = vld [vmem:[#allocation2 + $0xc8] sm:$0xff]
    %v82 = vld [vmem:[#allocation2 + $0xd0] sm:$0xff]
    %v83 = vld [vmem:[#allocation2 + $0xd8] sm:$0xff]
    %v84 = vld [vmem:[#allocation2 + $0xe0] sm:$0xff]
    %v85 = vld [vmem:[#allocation2 + $0xe8] sm:$0xff]
    %v86 = vld [vmem:[#allocation2 + $0xf0] sm:$0xff]
    %v87 = vld [vmem:[#allocation2 + $0xf8] sm:$0xff]
    %v88 = vld [vmem:[#allocation5] sm:$0xff]
    %v89 = vld [vmem:[#allocation5 + $0x8] sm:$0xff]
    %v90 = vld [vmem:[#allocation5 + $0x10] sm:$0xff]
    %v91 = vld [vmem:[#allocation5 + $0x18] sm:$0xff]
    %v92 = vld [vmem:[#allocation5 + $0x20] sm:$0xff]
    %v93 = vld [vmem:[#allocation5 + $0x28] sm:$0xff]
    %v94 = vld [vmem:[#allocation5 + $0x30] sm:$0xff]
    %v95 = vld [vmem:[#allocation5 + $0x38] sm:$0xff]
    %v96 = vld [vmem:[#allocation5 + $0x40] sm:$0xff]
    %v97 = vld [vmem:[#allocation5 + $0x48] sm:$0xff]
    %v98 = vld [vmem:[#allocation5 + $0x50] sm:$0xff]
    %v99 = vld [vmem:[#allocation5 + $0x58] sm:$0xff]
    %v100 = vld [vmem:[#allocation5 + $0x60] sm:$0xff]
    %v101 = vld [vmem:[#allocation5 + $0x68] sm:$0xff]
    %v102 = vld [vmem:[#allocation5 + $0x70] sm:$0xff]
    %v103 = vld [vmem:[#allocation5 + $0x78] sm:$0xff]
    %v104 = vld [vmem:[#allocation5 + $0x80] sm:$0xff]
    %v105 = vld [vmem:[#allocation5 + $0x88] sm:$0xff]
    %v106 = vld [vmem:[#allocation5 + $0x90] sm:$0xff]
    %v107 = vld [vmem:[#allocation5 + $0x98] sm:$0xff]
    %v108 = vld [vmem:[#allocation5 + $0xa0] sm:$0xff]
    %v109 = vld [vmem:[#allocation5 + $0xa8] sm:$0xff]
    %v110 = vld [vmem:[#allocation5 + $0xb0] sm:$0xff]
    %v111 = vld [vmem:[#allocation5 + $0xb8] sm:$0xff]
    %v112 = vld [vmem:[#allocation5 + $0xc0] sm:$0xff]
    %v113 = vld [vmem:[#allocation5 + $0xc8] sm:$0xff]
    %v114 = vld [vmem:[#allocation5 + $0xd0] sm:$0xff]
    %v115 = vld [vmem:[#allocation5 + $0xd8] sm:$0xff]
    %v116 = vld [vmem:[#allocation5 + $0xe0] sm:$0xff]
    %v117 = vld [vmem:[#allocation5 + $0xe8] sm:$0xff]
    %v118 = vld [vmem:[#allocation5 + $0xf0] sm:$0xff]
    %v119 = vld [vmem:[#allocation5 + $0xf8] sm:$0xff]
    %v120 = vld [vmem:[#allocation5 + $0x100] sm:$0xff]
    %v121 = vld [vmem:[#allocation5 + $0x108] sm:$0xff]
    %v122 = vld [vmem:[#allocation5 + $0x110] sm:$0xff]
    %v123 = vld [vmem:[#allocation5 + $0x118] sm:$0xff]
    %v124 = vld [vmem:[#allocation5 + $0x120] sm:$0xff]
    %v125 = vld [vmem:[#allocation5 + $0x128] sm:$0xff]
    %v126 = vld [vmem:[#allocation5 + $0x130] sm:$0xff]
    %v127 = vld [vmem:[#allocation5 + $0x138] sm:$0xff]
    %v128 = vld [vmem:[#allocation5 + $0x140] sm:$0xff]
    %v129 = vld [vmem:[#allocation5 + $0x148] sm:$0xff]
    %v130 = vld [vmem:[#allocation5 + $0x150] sm:$0xff]
    %v131 = vld [vmem:[#allocation5 + $0x158] sm:$0xff]
    %v132 = vld [vmem:[#allocation5 + $0x160] sm:$0xff]
    %v133 = vld [vmem:[#allocation5 + $0x168] sm:$0xff]
    %v134 = vld [vmem:[#allocation5 + $0x170] sm:$0xff]
    %v135 = vld [vmem:[#allocation5 + $0x178] sm:$0xff]
    %v136 = vld [vmem:[#allocation5 + $0x180] sm:$0xff]
    %v137 = vld [vmem:[#allocation5 + $0x188] sm:$0xff]
    %v138 = vld [vmem:[#allocation5 + $0x190] sm:$0xff]
    %v139 = vld [vmem:[#allocation5 + $0x198] sm:$0xff]
    %v140 = vld [vmem:[#allocation5 + $0x1a0] sm:$0xff]
    %v141 = vld [vmem:[#allocation5 + $0x1a8] sm:$0xff]
    %v142 = vld [vmem:[#allocation5 + $0x1b0] sm:$0xff]
    %v143 = vld [vmem:[#allocation5 + $0x1b8] sm:$0xff]
    %v144 = vld [vmem:[#allocation5 + $0x1c0] sm:$0xff]
    %v145 = vld [vmem:[#allocation5 + $0x1c8] sm:$0xff]
    %v146 = vld [vmem:[#allocation5 + $0x1d0] sm:$0xff]
    %v147 = vld [vmem:[#allocation5 + $0x1d8] sm:$0xff]
    %v148 = vld [vmem:[#allocation5 + $0x1e0] sm:$0xff]
    %v149 = vld [vmem:[#allocation5 + $0x1e8] sm:$0xff]
    %v150 = vld [vmem:[#allocation5 + $0x1f0] sm:$0xff]
    %v151 = vld [vmem:[#allocation5 + $0x1f8] sm:$0xff]
    %v152 = vld [vmem:[#allocation5 + $0x200] sm:$0xff]
    %v153 = vld [vmem:[#allocation5 + $0x208] sm:$0xff]
    %v154 = vld [vmem:[#allocation5 + $0x210] sm:$0xff]
    %v155 = vld [vmem:[#allocation5 + $0x218] sm:$0xff]
    %v156 = vld [vmem:[#allocation5 + $0x220] sm:$0xff]
    %v157 = vld [vmem:[#allocation5 + $0x228] sm:$0xff]
    %v158 = vld [vmem:[#allocation5 + $0x230] sm:$0xff]
    %v159 = vld [vmem:[#allocation5 + $0x238] sm:$0xff]
    %v160 = vld [vmem:[#allocation5 + $0x240] sm:$0xff]
    %v161 = vld [vmem:[#allocation5 + $0x248] sm:$0xff]
    %v162 = vld [vmem:[#allocation5 + $0x250] sm:$0xff]
    %v163 = vld [vmem:[#allocation5 + $0x258] sm:$0xff]
    %v164 = vld [vmem:[#allocation5 + $0x260] sm:$0xff]
    %v165 = vld [vmem:[#allocation5 + $0x268] sm:$0xff]
    %v166 = vld [vmem:[#allocation5 + $0x270] sm:$0xff]
    %v167 = vld [vmem:[#allocation5 + $0x278] sm:$0xff]
    %v168 = vld [vmem:[#allocation5 + $0x280] sm:$0xff]
    %v169 = vld [vmem:[#allocation5 + $0x288] sm:$0xff]
    %v170 = vld [vmem:[#allocation5 + $0x290] sm:$0xff]
    %v171 = vld [vmem:[#allocation5 + $0x298] sm:$0xff]
    %v172 = vld [vmem:[#allocation5 + $0x2a0] sm:$0xff]
    %v173 = vld [vmem:[#allocation5 + $0x2a8] sm:$0xff]
    %v174 = vld [vmem:[#allocation5 + $0x2b0] sm:$0xff]
    %v175 = vld [vmem:[#allocation5 + $0x2b8] sm:$0xff]
    %v176 = vld [vmem:[#allocation5 + $0x2c0] sm:$0xff]
    %v177 = vld [vmem:[#allocation5 + $0x2c8] sm:$0xff]
    %v178 = vld [vmem:[#allocation5 + $0x2d0] sm:$0xff]
    %v179 = vld [vmem:[#allocation5 + $0x2d8] sm:$0xff]
    %v180 = vld [vmem:[#allocation5 + $0x2e0] sm:$0xff]
    %v181 = vld [vmem:[#allocation5 + $0x2e8] sm:$0xff]
    %v182 = vld [vmem:[#allocation5 + $0x2f0] sm:$0xff]
    %v183 = vld [vmem:[#allocation5 + $0x2f8] sm:$0xff]
    %v184 = vld [vmem:[#allocation5 + $0x300] sm:$0xff]
    %v185 = vld [vmem:[#allocation5 + $0x308] sm:$0xff]
    %v186 = vld [vmem:[#allocation5 + $0x310] sm:$0xff]
    %v187 = vld [vmem:[#allocation5 + $0x318] sm:$0xff]
    %v188 = vld [vmem:[#allocation5 + $0x320] sm:$0xff]
    %v189 = vld [vmem:[#allocation5 + $0x328] sm:$0xff]
    %v190 = vld [vmem:[#allocation5 + $0x330] sm:$0xff]
    %v191 = vld [vmem:[#allocation5 + $0x338] sm:$0xff]
    %v192 = vld [vmem:[#allocation5 + $0x340] sm:$0xff]
    %v193 = vld [vmem:[#allocation5 + $0x348] sm:$0xff]
    %v194 = vld [vmem:[#allocation5 + $0x350] sm:$0xff]
    %v195 = vld [vmem:[#allocation5 + $0x358] sm:$0xff]
    %v196 = vld [vmem:[#allocation5 + $0x360] sm:$0xff]
    %v197 = vld [vmem:[#allocation5 + $0x368] sm:$0xff]
    %v198 = vld [vmem:[#allocation5 + $0x370] sm:$0xff]
    %v199 = vld [vmem:[#allocation5 + $0x378] sm:$0xff]
    %v200 = vld [vmem:[#allocation5 + $0x380] sm:$0xff]
    %v201 = vld [vmem:[#allocation5 + $0x388] sm:$0xff]
    %v202 = vld [vmem:[#allocation5 + $0x390] sm:$0xff]
    %v203 = vld [vmem:[#allocation5 + $0x398] sm:$0xff]
    %v204 = vld [vmem:[#allocation5 + $0x3a0] sm:$0xff]
    %v205 = vld [vmem:[#allocation5 + $0x3a8] sm:$0xff]
    %v206 = vld [vmem:[#allocation5 + $0x3b0] sm:$0xff]
    %v207 = vld [vmem:[#allocation5 + $0x3b8] sm:$0xff]
    %v208 = vld [vmem:[#allocation5 + $0x3c0] sm:$0xff]
    %v209 = vld [vmem:[#allocation5 + $0x3c8] sm:$0xff]
    %v210 = vld [vmem:[#allocation5 + $0x3d0] sm:$0xff]
    %v211 = vld [vmem:[#allocation5 + $0x3d8] sm:$0xff]
    %v212 = vld [vmem:[#allocation5 + $0x3e0] sm:$0xff]
    %v213 = vld [vmem:[#allocation5 + $0x3e8] sm:$0xff]
    %v214 = vld [vmem:[#allocation5 + $0x3f0] sm:$0xff]
    %v215 = vld [vmem:[#allocation5 + $0x3f8] sm:$0xff]
    %216 = vmatprep.subr.mxu0 %v149
    %217 = vmatpush1.msra.mxu0 %v148
    %218 = vmatprep.subr.mxu0 %v145
    %219 = vmatpush1.msra.mxu0 %v144
    %220 = vmatprep.subr.mxu0 %v141
    %221 = vmatpush1.msra.mxu0 %v140
    %222 = vmatprep.subr.mxu0 %v137
    %223 = vmatpush1.msra.mxu0 %v136
    %224 = vmatprep.subr.mxu0 %v133
    %225 = vmatpush1.msra.mxu0 %v132
    %226 = vmatprep.subr.mxu0 %v129
    %227 = vmatpush1.msra.mxu0 %v128
    %228 = vmatprep.subr.mxu0 %v125
    %229 = vmatpush1.msra.mxu0 %v124
    %230 = vmatprep.subr.mxu0 %v121
    %231 = vmatpush1.msra.mxu0 %v120
    %232 = vmatprep.subr.mxu0 %v117
    %233 = vmatpush1.msra.mxu0 %v116
    %234 = vmatprep.subr.mxu0 %v113
    %235 = vmatpush1.msra.mxu0 %v112
    %236 = vmatprep.subr.mxu0 %v109
    %237 = vmatpush1.msra.mxu0 %v108
    %238 = vmatprep.subr.mxu0 %v105
    %239 = vmatpush1.msra.mxu0 %v104
    %240 = vmatprep.subr.mxu0 %v101
    %241 = vmatpush1.msra.mxu0 %v100
    %242 = vmatprep.subr.mxu0 %v97
    %243 = vmatpush1.msra.mxu0 %v96
    %244 = vmatprep.subr.mxu0 %v93
    %245 = vmatpush1.msra.mxu0 %v92
    %246 = vmatprep.subr.mxu0 %v89
    %247 = vmatpush1.msra.mxu0 %v88
    %248 = vmatprep.subr.mxu0 %v213
    %249 = vmatpush2.msra.mxu0 %v212
    %250 = vmatprep.subr.mxu0 %v209
    %251 = vmatpush2.msra.mxu0 %v208
    %252 = vmatprep.subr.mxu0 %v205
    %253 = vmatpush2.msra.mxu0 %v204
    %254 = vmatprep.subr.mxu0 %v201
    %255 = vmatpush2.msra.mxu0 %v200
    %256 = vmatprep.subr.mxu0 %v197
    %257 = vmatpush2.msra.mxu0 %v196
    %258 = vmatprep.subr.mxu0 %v193
    %259 = vmatpush2.msra.mxu0 %v192
    %260 = vmatprep.subr.mxu0 %v189
    %261 = vmatpush2.msra.mxu0 %v188
    %262 = vmatprep.subr.mxu0 %v185
    %263 = vmatpush2.msra.mxu0 %v184
    %264 = vmatprep.subr.mxu0 %v181
    %265 = vmatpush2.msra.mxu0 %v180
    %266 = vmatprep.subr.mxu0 %v177
    %267 = vmatpush2.msra.mxu0 %v176
    %268 = vmatprep.subr.mxu0 %v173
    %269 = vmatpush2.msra.mxu0 %v172
    %270 = vmatprep.subr.mxu0 %v169
    %271 = vmatpush2.msra.mxu0 %v168
    %272 = vmatprep.subr.mxu0 %v165
    %273 = vmatpush2.msra.mxu0 %v164
    %274 = vmatprep.subr.mxu0 %v161
    %275 = vmatpush2.msra.mxu0 %v160
    %276 = vmatprep.subr.mxu0 %v157
    %277 = vmatpush2.msra.mxu0 %v156
    %278 = vmatprep.subr.mxu0 %v153
    %279 = vmatpush2.msra.mxu0 %v152
    %280 = vmatprep.mubr.f32.mxu0 %v57
    %281 = vmatmul.mubr.f32.gmra.mxu0 %v56
    %v282 = vpop.f32.mrf.mxu0
    %v283 = vadd.f32 0.0, %v282
    %v284 = vpop.f32.mrf.mxu0
    %v285 = vadd.f32 0.0, %v284
    %286 = vmatprep.mubr.f32.mxu0 %v59
    %287 = vmatmul.mubr.f32.gmra.mxu0 %v58
    %v288 = vpop.f32.mrf.mxu0
    %v289 = vadd.f32 0.0, %v288
    %v290 = vpop.f32.mrf.mxu0
    %v291 = vadd.f32 0.0, %v290
    %292 = vmatprep.mubr.f32.mxu0 %v61
    %293 = vmatmul.mubr.f32.gmra.mxu0 %v60
    %v294 = vpop.f32.mrf.mxu0
    %v295 = vadd.f32 0.0, %v294
    %v296 = vpop.f32.mrf.mxu0
    %v297 = vadd.f32 0.0, %v296
    %298 = vmatprep.mubr.f32.mxu0 %v63
    %299 = vmatmul.mubr.f32.gmra.mxu0 %v62
    %v300 = vpop.f32.mrf.mxu0
    %v301 = vadd.f32 0.0, %v300
    %v302 = vpop.f32.mrf.mxu0
    %v303 = vadd.f32 0.0, %v302
    %304 = vmatprep.mubr.f32.mxu0 %v65
    %305 = vmatmul.mubr.f32.gmra.mxu0 %v64
    %v306 = vpop.f32.mrf.mxu0
    %v307 = vadd.f32 0.0, %v306
    %v308 = vpop.f32.mrf.mxu0
    %v309 = vadd.f32 0.0, %v308
    %310 = vmatprep.mubr.f32.mxu0 %v67
    %311 = vmatmul.mubr.f32.gmra.mxu0 %v66
    %v312 = vpop.f32.mrf.mxu0
    %v313 = vadd.f32 0.0, %v312
    %v314 = vpop.f32.mrf.mxu0
    %v315 = vadd.f32 0.0, %v314
    %316 = vmatprep.mubr.f32.mxu0 %v69
    %317 = vmatmul.mubr.f32.gmra.mxu0 %v68
    %v318 = vpop.f32.mrf.mxu0
    %v319 = vadd.f32 0.0, %v318
    %v320 = vpop.f32.mrf.mxu0
    %v321 = vadd.f32 0.0, %v320
    %322 = vmatprep.mubr.f32.mxu0 %v71
    %323 = vmatmul.mubr.f32.gmra.mxu0 %v70
    %v324 = vpop.f32.mrf.mxu0
    %v325 = vadd.f32 0.0, %v324
    %v326 = vpop.f32.mrf.mxu0
    %v327 = vadd.f32 0.0, %v326
    %328 = vmatprep.mubr.f32.mxu0 %v73
    %329 = vmatmul.mubr.f32.gmra.mxu0 %v72
    %v330 = vpop.f32.mrf.mxu0
    %v331 = vadd.f32 0.0, %v330
    %v332 = vpop.f32.mrf.mxu0
    %v333 = vadd.f32 0.0, %v332
    %334 = vmatprep.mubr.f32.mxu0 %v75
    %335 = vmatmul.mubr.f32.gmra.mxu0 %v74
    %v336 = vpop.f32.mrf.mxu0
    %v337 = vadd.f32 0.0, %v336
    %v338 = vpop.f32.mrf.mxu0
    %v339 = vadd.f32 0.0, %v338
    %340 = vmatprep.mubr.f32.mxu0 %v77
    %341 = vmatmul.mubr.f32.gmra.mxu0 %v76
    %v342 = vpop.f32.mrf.mxu0
    %v343 = vadd.f32 0.0, %v342
    %v344 = vpop.f32.mrf.mxu0
    %v345 = vadd.f32 0.0, %v344
    %346 = vmatprep.mubr.f32.mxu0 %v79
    %347 = vmatmul.mubr.f32.gmra.mxu0 %v78
    %v348 = vpop.f32.mrf.mxu0
    %v349 = vadd.f32 0.0, %v348
    %v350 = vpop.f32.mrf.mxu0
    %v351 = vadd.f32 0.0, %v350
    %352 = vmatprep.mubr.f32.mxu0 %v81
    %353 = vmatmul.mubr.f32.gmra.mxu0 %v80
    %v354 = vpop.f32.mrf.mxu0
    %v355 = vadd.f32 0.0, %v354
    %v356 = vpop.f32.mrf.mxu0
    %v357 = vadd.f32 0.0, %v356
    %358 = vmatprep.mubr.f32.mxu0 %v83
    %359 = vmatmul.mubr.f32.gmra.mxu0 %v82
    %v360 = vpop.f32.mrf.mxu0
    %v361 = vadd.f32 0.0, %v360
    %v362 = vpop.f32.mrf.mxu0
    %v363 = vadd.f32 0.0, %v362
    %364 = vmatprep.mubr.f32.mxu0 %v85
    %365 = vmatmul.mubr.f32.gmra.mxu0 %v84
    %v366 = vpop.f32.mrf.mxu0
    %v367 = vadd.f32 0.0, %v366
    %v368 = vpop.f32.mrf.mxu0
    %v369 = vadd.f32 0.0, %v368
    %370 = vmatprep.mubr.f32.mxu0 %v87
    %371 = vmatmul.mubr.f32.gmra.mxu0 %v86
    %v372 = vpop.f32.mrf.mxu0
    %v373 = vadd.f32 0.0, %v372
    %v374 = vpop.f32.mrf.mxu0
    %v375 = vadd.f32 0.0, %v374
    %376 = vdwg.mxu0
    %377 = vmatprep.subr.mxu0 %v151
    %378 = vmatpush1.msra.mxu0 %v150
    %379 = vmatprep.subr.mxu0 %v147
    %380 = vmatpush1.msra.mxu0 %v146
    %381 = vmatprep.subr.mxu0 %v143
    %382 = vmatpush1.msra.mxu0 %v142
    %383 = vmatprep.subr.mxu0 %v139
    %384 = vmatpush1.msra.mxu0 %v138
    %385 = vmatprep.subr.mxu0 %v135
    %386 = vmatpush1.msra.mxu0 %v134
    %387 = vmatprep.subr.mxu0 %v131
    %388 = vmatpush1.msra.mxu0 %v130
    %389 = vmatprep.subr.mxu0 %v127
    %390 = vmatpush1.msra.mxu0 %v126
    %391 = vmatprep.subr.mxu0 %v123
    %392 = vmatpush1.msra.mxu0 %v122
    %393 = vmatprep.subr.mxu0 %v119
    %394 = vmatpush1.msra.mxu0 %v118
    %395 = vmatprep.subr.mxu0 %v115
    %396 = vmatpush1.msra.mxu0 %v114
    %397 = vmatprep.subr.mxu0 %v111
    %398 = vmatpush1.msra.mxu0 %v110
    %399 = vmatprep.subr.mxu0 %v107
    %400 = vmatpush1.msra.mxu0 %v106
    %401 = vmatprep.subr.mxu0 %v103
    %402 = vmatpush1.msra.mxu0 %v102
    %403 = vmatprep.subr.mxu0 %v99
    %404 = vmatpush1.msra.mxu0 %v98
    %405 = vmatprep.subr.mxu0 %v95
    %406 = vmatpush1.msra.mxu0 %v94
    %407 = vmatprep.subr.mxu0 %v91
    %408 = vmatpush1.msra.mxu0 %v90
    %409 = vmatprep.subr.mxu0 %v215
    %410 = vmatpush2.msra.mxu0 %v214
    %411 = vmatprep.subr.mxu0 %v211
    %412 = vmatpush2.msra.mxu0 %v210
    %413 = vmatprep.subr.mxu0 %v207
    %414 = vmatpush2.msra.mxu0 %v206
    %415 = vmatprep.subr.mxu0 %v203
    %416 = vmatpush2.msra.mxu0 %v202
    %417 = vmatprep.subr.mxu0 %v199
    %418 = vmatpush2.msra.mxu0 %v198
    %419 = vmatprep.subr.mxu0 %v195
    %420 = vmatpush2.msra.mxu0 %v194
    %421 = vmatprep.subr.mxu0 %v191
    %422 = vmatpush2.msra.mxu0 %v190
    %423 = vmatprep.subr.mxu0 %v187
    %424 = vmatpush2.msra.mxu0 %v186
    %425 = vmatprep.subr.mxu0 %v183
    %426 = vmatpush2.msra.mxu0 %v182
    %427 = vmatprep.subr.mxu0 %v179
    %428 = vmatpush2.msra.mxu0 %v178
    %429 = vmatprep.subr.mxu0 %v175
    %430 = vmatpush2.msra.mxu0 %v174
    %431 = vmatprep.subr.mxu0 %v171
    %432 = vmatpush2.msra.mxu0 %v170
    %433 = vmatprep.subr.mxu0 %v167
    %434 = vmatpush2.msra.mxu0 %v166
    %435 = vmatprep.subr.mxu0 %v163
    %436 = vmatpush2.msra.mxu0 %v162
    %437 = vmatprep.subr.mxu0 %v159
    %438 = vmatpush2.msra.mxu0 %v158
    %439 = vmatprep.subr.mxu0 %v155
    %440 = vmatpush2.msra.mxu0 %v154
    %441 = vmatprep.mubr.f32.mxu0 %v57
    %442 = vmatmul.mubr.f32.gmra.mxu0 %v56
    %v443 = vpop.f32.mrf.mxu0
    %v444 = vadd.f32 0.0, %v443
    %v445 = vpop.f32.mrf.mxu0
    %v446 = vadd.f32 0.0, %v445
    %447 = vmatprep.mubr.f32.mxu0 %v59
    %448 = vmatmul.mubr.f32.gmra.mxu0 %v58
    %v449 = vpop.f32.mrf.mxu0
    %v450 = vadd.f32 0.0, %v449
    %v451 = vpop.f32.mrf.mxu0
    %v452 = vadd.f32 0.0, %v451
    %453 = vmatprep.mubr.f32.mxu0 %v61
    %454 = vmatmul.mubr.f32.gmra.mxu0 %v60
    %v455 = vpop.f32.mrf.mxu0
    %v456 = vadd.f32 0.0, %v455
    %v457 = vpop.f32.mrf.mxu0
    %v458 = vadd.f32 0.0, %v457
    %459 = vmatprep.mubr.f32.mxu0 %v63
    %460 = vmatmul.mubr.f32.gmra.mxu0 %v62
    %v461 = vpop.f32.mrf.mxu0
    %v462 = vadd.f32 0.0, %v461
    %v463 = vpop.f32.mrf.mxu0
    %v464 = vadd.f32 0.0, %v463
    %465 = vmatprep.mubr.f32.mxu0 %v65
    %466 = vmatmul.mubr.f32.gmra.mxu0 %v64
    %v467 = vpop.f32.mrf.mxu0
    %v468 = vadd.f32 0.0, %v467
    %v469 = vpop.f32.mrf.mxu0
    %v470 = vadd.f32 0.0, %v469
    %471 = vmatprep.mubr.f32.mxu0 %v67
    %472 = vmatmul.mubr.f32.gmra.mxu0 %v66
    %v473 = vpop.f32.mrf.mxu0
    %v474 = vadd.f32 0.0, %v473
    %v475 = vpop.f32.mrf.mxu0
    %v476 = vadd.f32 0.0, %v475
    %477 = vmatprep.mubr.f32.mxu0 %v69
    %478 = vmatmul.mubr.f32.gmra.mxu0 %v68
    %v479 = vpop.f32.mrf.mxu0
    %v480 = vadd.f32 0.0, %v479
    %v481 = vpop.f32.mrf.mxu0
    %v482 = vadd.f32 0.0, %v481
    %483 = vmatprep.mubr.f32.mxu0 %v71
    %484 = vmatmul.mubr.f32.gmra.mxu0 %v70
    %v485 = vpop.f32.mrf.mxu0
    %v486 = vadd.f32 0.0, %v485
    %v487 = vpop.f32.mrf.mxu0
    %v488 = vadd.f32 0.0, %v487
    %489 = vmatprep.mubr.f32.mxu0 %v73
    %490 = vmatmul.mubr.f32.gmra.mxu0 %v72
    %v491 = vpop.f32.mrf.mxu0
    %v492 = vadd.f32 0.0, %v491
    %v493 = vpop.f32.mrf.mxu0
    %v494 = vadd.f32 0.0, %v493
    %495 = vmatprep.mubr.f32.mxu0 %v75
    %496 = vmatmul.mubr.f32.gmra.mxu0 %v74
    %v497 = vpop.f32.mrf.mxu0
    %v498 = vadd.f32 0.0, %v497
    %v499 = vpop.f32.mrf.mxu0
    %v500 = vadd.f32 0.0, %v499
    %501 = vmatprep.mubr.f32.mxu0 %v77
    %502 = vmatmul.mubr.f32.gmra.mxu0 %v76
    %v503 = vpop.f32.mrf.mxu0
    %v504 = vadd.f32 0.0, %v503
    %v505 = vpop.f32.mrf.mxu0
    %v506 = vadd.f32 0.0, %v505
    %507 = vmatprep.mubr.f32.mxu0 %v79
    %508 = vmatmul.mubr.f32.gmra.mxu0 %v78
    %v509 = vpop.f32.mrf.mxu0
    %v510 = vadd.f32 0.0, %v509
    %v511 = vpop.f32.mrf.mxu0
    %v512 = vadd.f32 0.0, %v511
    %513 = vmatprep.mubr.f32.mxu0 %v81
    %514 = vmatmul.mubr.f32.gmra.mxu0 %v80
    %v515 = vpop.f32.mrf.mxu0
    %v516 = vadd.f32 0.0, %v515
    %v517 = vpop.f32.mrf.mxu0
    %v518 = vadd.f32 0.0, %v517
    %519 = vmatprep.mubr.f32.mxu0 %v83
    %520 = vmatmul.mubr.f32.gmra.mxu0 %v82
    %v521 = vpop.f32.mrf.mxu0
    %v522 = vadd.f32 0.0, %v521
    %v523 = vpop.f32.mrf.mxu0
    %v524 = vadd.f32 0.0, %v523
    %525 = vmatprep.mubr.f32.mxu0 %v85
    %526 = vmatmul.mubr.f32.gmra.mxu0 %v84
    %v527 = vpop.f32.mrf.mxu0
    %v528 = vadd.f32 0.0, %v527
    %v529 = vpop.f32.mrf.mxu0
    %v530 = vadd.f32 0.0, %v529
    %531 = vmatprep.mubr.f32.mxu0 %v87
    %532 = vmatmul.mubr.f32.gmra.mxu0 %v86
    %v533 = vpop.f32.mrf.mxu0
    %v534 = vadd.f32 0.0, %v533
    %v535 = vpop.f32.mrf.mxu0
    %v536 = vadd.f32 0.0, %v535
    %537 = vdwg.mxu0
    %v538 = vmul.f32 %v283, %v283
    %v539 = vmul.f32 %v285, %v285
    %v540 = vmul.f32 %v289, %v289
    %v541 = vmul.f32 %v291, %v291
    %v542 = vmul.f32 %v295, %v295
    %v543 = vmul.f32 %v297, %v297
    %v544 = vmul.f32 %v301, %v301
    %v545 = vmul.f32 %v303, %v303
    %v546 = vmul.f32 %v307, %v307
    %v547 = vmul.f32 %v309, %v309
    %v548 = vmul.f32 %v313, %v313
    %v549 = vmul.f32 %v315, %v315
    %v550 = vmul.f32 %v319, %v319
    %v551 = vmul.f32 %v321, %v321
    %v552 = vmul.f32 %v325, %v325
    %v553 = vmul.f32 %v327, %v327
    %v554 = vmul.f32 %v331, %v331
    %v555 = vmul.f32 %v333, %v333
    %v556 = vmul.f32 %v337, %v337
    %v557 = vmul.f32 %v339, %v339
    %v558 = vmul.f32 %v343, %v343
    %v559 = vmul.f32 %v345, %v345
    %v560 = vmul.f32 %v349, %v349
    %v561 = vmul.f32 %v351, %v351
    %v562 = vmul.f32 %v355, %v355
    %v563 = vmul.f32 %v357, %v357
    %v564 = vmul.f32 %v361, %v361
    %v565 = vmul.f32 %v363, %v363
    %v566 = vmul.f32 %v367, %v367
    %v567 = vmul.f32 %v369, %v369
    %v568 = vmul.f32 %v373, %v373
    %v569 = vmul.f32 %v375, %v375
    %v570 = vmul.f32 %v444, %v444
    %v571 = vmul.f32 %v446, %v446
    %v572 = vmul.f32 %v450, %v450
    %v573 = vmul.f32 %v452, %v452
    %v574 = vmul.f32 %v456, %v456
    %v575 = vmul.f32 %v458, %v458
    %v576 = vmul.f32 %v462, %v462
    %v577 = vmul.f32 %v464, %v464
    %v578 = vmul.f32 %v468, %v468
    %v579 = vmul.f32 %v470, %v470
    %v580 = vmul.f32 %v474, %v474
    %v581 = vmul.f32 %v476, %v476
    %v582 = vmul.f32 %v480, %v480
    %v583 = vmul.f32 %v482, %v482
    %v584 = vmul.f32 %v486, %v486
    %v585 = vmul.f32 %v488, %v488
    %v586 = vmul.f32 %v492, %v492
    %v587 = vmul.f32 %v494, %v494
    %v588 = vmul.f32 %v498, %v498
    %v589 = vmul.f32 %v500, %v500
    %v590 = vmul.f32 %v504, %v504
    %v591 = vmul.f32 %v506, %v506
    %v592 = vmul.f32 %v510, %v510
    %v593 = vmul.f32 %v512, %v512
    %v594 = vmul.f32 %v516, %v516
    %v595 = vmul.f32 %v518, %v518
    %v596 = vmul.f32 %v522, %v522
    %v597 = vmul.f32 %v524, %v524
    %v598 = vmul.f32 %v528, %v528
    %v599 = vmul.f32 %v530, %v530
    %v600 = vmul.f32 %v534, %v534
    %v601 = vmul.f32 %v536, %v536
    %v602 = vadd.f32 %v538, %v570
    %v603 = vadd.f32 %v539, %v571
    %v604 = vadd.f32 %v540, %v572
    %v605 = vadd.f32 %v541, %v573
    %v606 = vadd.f32 %v542, %v574
    %v607 = vadd.f32 %v543, %v575
    %v608 = vadd.f32 %v544, %v576
    %v609 = vadd.f32 %v545, %v577
    %v610 = vadd.f32 %v546, %v578
    %v611 = vadd.f32 %v547, %v579
    %v612 = vadd.f32 %v548, %v580
    %v613 = vadd.f32 %v549, %v581
    %v614 = vadd.f32 %v550, %v582
    %v615 = vadd.f32 %v551, %v583
    %v616 = vadd.f32 %v552, %v584
    %v617 = vadd.f32 %v553, %v585
    %v618 = vadd.f32 %v554, %v586
    %v619 = vadd.f32 %v555, %v587
    %v620 = vadd.f32 %v556, %v588
    %v621 = vadd.f32 %v557, %v589
    %v622 = vadd.f32 %v558, %v590
    %v623 = vadd.f32 %v559, %v591
    %v624 = vadd.f32 %v560, %v592
    %v625 = vadd.f32 %v561, %v593
    %v626 = vadd.f32 %v562, %v594
    %v627 = vadd.f32 %v563, %v595
    %v628 = vadd.f32 %v564, %v596
    %v629 = vadd.f32 %v565, %v597
    %v630 = vadd.f32 %v566, %v598
    %v631 = vadd.f32 %v567, %v599
    %v632 = vadd.f32 %v568, %v600
    %v633 = vadd.f32 %v569, %v601
    %v634 = vld [vmem:[#allocation7] sm:$0xff]
    %v635 = vld [vmem:[#allocation7 + $0x8] sm:$0xff]
    %v636 = vld [vmem:[#allocation7 + $0x10] sm:$0xff]
    %v637 = vld [vmem:[#allocation7 + $0x18] sm:$0xff]
    %v638 = vld [vmem:[#allocation7 + $0x20] sm:$0xff]
    %v639 = vld [vmem:[#allocation7 + $0x28] sm:$0xff]
    %v640 = vld [vmem:[#allocation7 + $0x30] sm:$0xff]
    %v641 = vld [vmem:[#allocation7 + $0x38] sm:$0xff]
    %v642 = vld [vmem:[#allocation7 + $0x40] sm:$0xff]
    %v643 = vld [vmem:[#allocation7 + $0x48] sm:$0xff]
    %v644 = vld [vmem:[#allocation7 + $0x50] sm:$0xff]
    %v645 = vld [vmem:[#allocation7 + $0x58] sm:$0xff]
    %v646 = vld [vmem:[#allocation7 + $0x60] sm:$0xff]
    %v647 = vld [vmem:[#allocation7 + $0x68] sm:$0xff]
    %v648 = vld [vmem:[#allocation7 + $0x70] sm:$0xff]
    %v649 = vld [vmem:[#allocation7 + $0x78] sm:$0xff]
    %v650 = vld [vmem:[#allocation7 + $0x80] sm:$0xff]
    %v651 = vld [vmem:[#allocation7 + $0x88] sm:$0xff]
    %v652 = vld [vmem:[#allocation7 + $0x90] sm:$0xff]
    %v653 = vld [vmem:[#allocation7 + $0x98] sm:$0xff]
    %v654 = vld [vmem:[#allocation7 + $0xa0] sm:$0xff]
    %v655 = vld [vmem:[#allocation7 + $0xa8] sm:$0xff]
    %v656 = vld [vmem:[#allocation7 + $0xb0] sm:$0xff]
    %v657 = vld [vmem:[#allocation7 + $0xb8] sm:$0xff]
    %v658 = vld [vmem:[#allocation7 + $0xc0] sm:$0xff]
    %v659 = vld [vmem:[#allocation7 + $0xc8] sm:$0xff]
    %v660 = vld [vmem:[#allocation7 + $0xd0] sm:$0xff]
    %v661 = vld [vmem:[#allocation7 + $0xd8] sm:$0xff]
    %v662 = vld [vmem:[#allocation7 + $0xe0] sm:$0xff]
    %v663 = vld [vmem:[#allocation7 + $0xe8] sm:$0xff]
    %v664 = vld [vmem:[#allocation7 + $0xf0] sm:$0xff]
    %v665 = vld [vmem:[#allocation7 + $0xf8] sm:$0xff]
    %666 = vmatprep.subr.mxu0 0.0
    %667 = vmatpush1.msra.mxu0 %v649
    %668 = vmatprep.subr.mxu0 0.0
    %669 = vmatpush1.msra.mxu0 %v648
    %670 = vmatprep.subr.mxu0 0.0
    %671 = vmatpush1.msra.mxu0 %v647
    %672 = vmatprep.subr.mxu0 0.0
    %673 = vmatpush1.msra.mxu0 %v646
    %674 = vmatprep.subr.mxu0 0.0
    %675 = vmatpush1.msra.mxu0 %v645
    %676 = vmatprep.subr.mxu0 0.0
    %677 = vmatpush1.msra.mxu0 %v644
    %678 = vmatprep.subr.mxu0 0.0
    %679 = vmatpush1.msra.mxu0 %v643
    %680 = vmatprep.subr.mxu0 0.0
    %681 = vmatpush1.msra.mxu0 %v642
    %682 = vmatprep.subr.mxu0 0.0
    %683 = vmatpush1.msra.mxu0 %v641
    %684 = vmatprep.subr.mxu0 0.0
    %685 = vmatpush1.msra.mxu0 %v640
    %686 = vmatprep.subr.mxu0 0.0
    %687 = vmatpush1.msra.mxu0 %v639
    %688 = vmatprep.subr.mxu0 0.0
    %689 = vmatpush1.msra.mxu0 %v638
    %690 = vmatprep.subr.mxu0 0.0
    %691 = vmatpush1.msra.mxu0 %v637
    %692 = vmatprep.subr.mxu0 0.0
    %693 = vmatpush1.msra.mxu0 %v636
    %694 = vmatprep.subr.mxu0 0.0
    %695 = vmatpush1.msra.mxu0 %v635
    %696 = vmatprep.subr.mxu0 0.0
    %697 = vmatpush1.msra.mxu0 %v634
    %698 = vmatprep.subr.mxu0 0.0
    %699 = vmatpush2.msra.mxu0 %v665
    %700 = vmatprep.subr.mxu0 0.0
    %701 = vmatpush2.msra.mxu0 %v664
    %702 = vmatprep.subr.mxu0 0.0
    %703 = vmatpush2.msra.mxu0 %v663
    %704 = vmatprep.subr.mxu0 0.0
    %705 = vmatpush2.msra.mxu0 %v662
    %706 = vmatprep.subr.mxu0 0.0
    %707 = vmatpush2.msra.mxu0 %v661
    %708 = vmatprep.subr.mxu0 0.0
    %709 = vmatpush2.msra.mxu0 %v660
    %710 = vmatprep.subr.mxu0 0.0
    %711 = vmatpush2.msra.mxu0 %v659
    %712 = vmatprep.subr.mxu0 0.0
    %713 = vmatpush2.msra.mxu0 %v658
    %714 = vmatprep.subr.mxu0 0.0
    %715 = vmatpush2.msra.mxu0 %v657
    %716 = vmatprep.subr.mxu0 0.0
    %717 = vmatpush2.msra.mxu0 %v656
    %718 = vmatprep.subr.mxu0 0.0
    %719 = vmatpush2.msra.mxu0 %v655
    %720 = vmatprep.subr.mxu0 0.0
    %721 = vmatpush2.msra.mxu0 %v654
    %722 = vmatprep.subr.mxu0 0.0
    %723 = vmatpush2.msra.mxu0 %v653
    %724 = vmatprep.subr.mxu0 0.0
    %725 = vmatpush2.msra.mxu0 %v652
    %726 = vmatprep.subr.mxu0 0.0
    %727 = vmatpush2.msra.mxu0 %v651
    %728 = vmatprep.subr.mxu0 0.0
    %729 = vmatpush2.msra.mxu0 %v650
    %730 = vmatprep.mubr.f32.mxu0 %v603
    %731 = vmatmul.mubr.f32.gmra.mxu0 %v602
    %v732 = vpop.f32.mrf.mxu0
    %v733 = vadd.f32 0.0, %v732
    %v734 = vpop.f32.mrf.mxu0
    %735 = vmatprep.mubr.f32.mxu0 %v605
    %736 = vmatmul.mubr.f32.gmra.mxu0 %v604
    %v737 = vpop.f32.mrf.mxu0
    %v738 = vadd.f32 0.0, %v737
    %v739 = vpop.f32.mrf.mxu0
    %740 = vmatprep.mubr.f32.mxu0 %v607
    %741 = vmatmul.mubr.f32.gmra.mxu0 %v606
    %v742 = vpop.f32.mrf.mxu0
    %v743 = vadd.f32 0.0, %v742
    %v744 = vpop.f32.mrf.mxu0
    %745 = vmatprep.mubr.f32.mxu0 %v609
    %746 = vmatmul.mubr.f32.gmra.mxu0 %v608
    %v747 = vpop.f32.mrf.mxu0
    %v748 = vadd.f32 0.0, %v747
    %v749 = vpop.f32.mrf.mxu0
    %750 = vmatprep.mubr.f32.mxu0 %v611
    %751 = vmatmul.mubr.f32.gmra.mxu0 %v610
    %v752 = vpop.f32.mrf.mxu0
    %v753 = vadd.f32 0.0, %v752
    %v754 = vpop.f32.mrf.mxu0
    %755 = vmatprep.mubr.f32.mxu0 %v613
    %756 = vmatmul.mubr.f32.gmra.mxu0 %v612
    %v757 = vpop.f32.mrf.mxu0
    %v758 = vadd.f32 0.0, %v757
    %v759 = vpop.f32.mrf.mxu0
    %760 = vmatprep.mubr.f32.mxu0 %v615
    %761 = vmatmul.mubr.f32.gmra.mxu0 %v614
    %v762 = vpop.f32.mrf.mxu0
    %v763 = vadd.f32 0.0, %v762
    %v764 = vpop.f32.mrf.mxu0
    %765 = vmatprep.mubr.f32.mxu0 %v617
    %766 = vmatmul.mubr.f32.gmra.mxu0 %v616
    %v767 = vpop.f32.mrf.mxu0
    %v768 = vadd.f32 0.0, %v767
    %v769 = vpop.f32.mrf.mxu0
    %770 = vmatprep.mubr.f32.mxu0 %v619
    %771 = vmatmul.mubr.f32.gmra.mxu0 %v618
    %v772 = vpop.f32.mrf.mxu0
    %v773 = vadd.f32 0.0, %v772
    %v774 = vpop.f32.mrf.mxu0
    %775 = vmatprep.mubr.f32.mxu0 %v621
    %776 = vmatmul.mubr.f32.gmra.mxu0 %v620
    %v777 = vpop.f32.mrf.mxu0
    %v778 = vadd.f32 0.0, %v777
    %v779 = vpop.f32.mrf.mxu0
    %780 = vmatprep.mubr.f32.mxu0 %v623
    %781 = vmatmul.mubr.f32.gmra.mxu0 %v622
    %v782 = vpop.f32.mrf.mxu0
    %v783 = vadd.f32 0.0, %v782
    %v784 = vpop.f32.mrf.mxu0
    %785 = vmatprep.mubr.f32.mxu0 %v625
    %786 = vmatmul.mubr.f32.gmra.mxu0 %v624
    %v787 = vpop.f32.mrf.mxu0
    %v788 = vadd.f32 0.0, %v787
    %v789 = vpop.f32.mrf.mxu0
    %790 = vmatprep.mubr.f32.mxu0 %v627
    %791 = vmatmul.mubr.f32.gmra.mxu0 %v626
    %v792 = vpop.f32.mrf.mxu0
    %v793 = vadd.f32 0.0, %v792
    %v794 = vpop.f32.mrf.mxu0
    %795 = vmatprep.mubr.f32.mxu0 %v629
    %796 = vmatmul.mubr.f32.gmra.mxu0 %v628
    %v797 = vpop.f32.mrf.mxu0
    %v798 = vadd.f32 0.0, %v797
    %v799 = vpop.f32.mrf.mxu0
    %800 = vmatprep.mubr.f32.mxu0 %v631
    %801 = vmatmul.mubr.f32.gmra.mxu0 %v630
    %v802 = vpop.f32.mrf.mxu0
    %v803 = vadd.f32 0.0, %v802
    %v804 = vpop.f32.mrf.mxu0
    %805 = vmatprep.mubr.f32.mxu0 %v633
    %806 = vmatmul.mubr.f32.gmra.mxu0 %v632
    %v807 = vpop.f32.mrf.mxu0
    %v808 = vadd.f32 0.0, %v807
    %v809 = vpop.f32.mrf.mxu0
    %810 = vdwg.mxu0
    %v811 = vmax.f32 %v733, 1e-10
    %v812 = vmax.f32 %v738, 1e-10
    %v813 = vmax.f32 %v743, 1e-10
    %v814 = vmax.f32 %v748, 1e-10
    %v815 = vmax.f32 %v753, 1e-10
    %v816 = vmax.f32 %v758, 1e-10
    %v817 = vmax.f32 %v763, 1e-10
    %v818 = vmax.f32 %v768, 1e-10
    %v819 = vmax.f32 %v773, 1e-10
    %v820 = vmax.f32 %v778, 1e-10
    %v821 = vmax.f32 %v783, 1e-10
    %v822 = vmax.f32 %v788, 1e-10
    %v823 = vmax.f32 %v793, 1e-10
    %v824 = vmax.f32 %v798, 1e-10
    %v825 = vmax.f32 %v803, 1e-10
    %v826 = vmax.f32 %v808, 1e-10
    %v827 = vlog2.pop %v811
    %v828 = vmul.f32 %v827, 0.6931472
    %v829 = vlog2.pop %v812
    %v830 = vmul.f32 %v829, 0.6931472
    %v831 = vlog2.pop %v813
    %v832 = vmul.f32 %v831, 0.6931472
    %v833 = vlog2.pop %v814
    %v834 = vmul.f32 %v833, 0.6931472
    %v835 = vlog2.pop %v815
    %v836 = vmul.f32 %v835, 0.6931472
    %v837 = vlog2.pop %v816
    %v838 = vmul.f32 %v837, 0.6931472
    %v839 = vlog2.pop %v817
    %v840 = vmul.f32 %v839, 0.6931472
    %v841 = vlog2.pop %v818
    %v842 = vmul.f32 %v841, 0.6931472
    %v843 = vlog2.pop %v819
    %v844 = vmul.f32 %v843, 0.6931472
    %v845 = vlog2.pop %v820
    %v846 = vmul.f32 %v845, 0.6931472
    %v847 = vlog2.pop %v821
    %v848 = vmul.f32 %v847, 0.6931472
    %v849 = vlog2.pop %v822
    %v850 = vmul.f32 %v849, 0.6931472
    %v851 = vlog2.pop %v823
    %v852 = vmul.f32 %v851, 0.6931472
    %v853 = vlog2.pop %v824
    %v854 = vmul.f32 %v853, 0.6931472
    %v855 = vlog2.pop %v825
    %v856 = vmul.f32 %v855, 0.6931472
    %v857 = vlog2.pop %v826
    %v858 = vmul.f32 %v857, 0.6931472
    %v859 = vmul.f32 %v828, 0.4342945
    %v860 = vmul.f32 %v830, 0.4342945
    %v861 = vmul.f32 %v832, 0.4342945
    %v862 = vmul.f32 %v834, 0.4342945
    %v863 = vmul.f32 %v836, 0.4342945
    %v864 = vmul.f32 %v838, 0.4342945
    %v865 = vmul.f32 %v840, 0.4342945
    %v866 = vmul.f32 %v842, 0.4342945
    %v867 = vmul.f32 %v844, 0.4342945
    %v868 = vmul.f32 %v846, 0.4342945
    %v869 = vmul.f32 %v848, 0.4342945
    %v870 = vmul.f32 %v850, 0.4342945
    %v871 = vmul.f32 %v852, 0.4342945
    %v872 = vmul.f32 %v854, 0.4342945
    %v873 = vmul.f32 %v856, 0.4342945
    %v874 = vmul.f32 %v858, 0.4342945
    %v875 = vmul.f32 %v859, 10.0
    %v876 = vmul.f32 %v860, 10.0
    %v877 = vmul.f32 %v861, 10.0
    %v878 = vmul.f32 %v862, 10.0
    %v879 = vmul.f32 %v863, 10.0
    %v880 = vmul.f32 %v864, 10.0
    %v881 = vmul.f32 %v865, 10.0
    %v882 = vmul.f32 %v866, 10.0
    %v883 = vmul.f32 %v867, 10.0
    %v884 = vmul.f32 %v868, 10.0
    %v885 = vmul.f32 %v869, 10.0
    %v886 = vmul.f32 %v870, 10.0
    %v887 = vmul.f32 %v871, 10.0
    %v888 = vmul.f32 %v872, 10.0
    %v889 = vmul.f32 %v873, 10.0
    %v890 = vmul.f32 %v874, 10.0
    %891 = vst [vmem:[#allocation8] sm:$0xff] %v875
    %892 = vst [vmem:[#allocation8 + $0x8] sm:$0xff] %v876
    %893 = vst [vmem:[#allocation8 + $0x10] sm:$0xff] %v877
    %894 = vst [vmem:[#allocation8 + $0x18] sm:$0xff] %v878
    %895 = vst [vmem:[#allocation8 + $0x20] sm:$0xff] %v879
    %896 = vst [vmem:[#allocation8 + $0x28] sm:$0xff] %v880
    %897 = vst [vmem:[#allocation8 + $0x30] sm:$0xff] %v881
    %898 = vst [vmem:[#allocation8 + $0x38] sm:$0xff] %v882
    %899 = vst [vmem:[#allocation8 + $0x40] sm:$0xff] %v883
    %900 = vst [vmem:[#allocation8 + $0x48] sm:$0xff] %v884
    %901 = vst [vmem:[#allocation8 + $0x50] sm:$0xff] %v885
    %902 = vst [vmem:[#allocation8 + $0x58] sm:$0xff] %v886
    %903 = vst [vmem:[#allocation8 + $0x60] sm:$0xff] %v887
    %904 = vst [vmem:[#allocation8 + $0x68] sm:$0xff] %v888
    %905 = vst [vmem:[#allocation8 + $0x70] sm:$0xff] %v889
    %906 = vst [vmem:[#allocation8 + $0x78] sm:$0xff] %v890
    // Predicated region
    $region26: #{tpu_custom_call.1} parent=1 // pred_check
      _
    $region27: #{tpu_custom_call.1} parent=1 // pred_check_branch
      %908 = sbr.rel (0) target = $region29
    $region28: #{tpu_custom_call.1} parent=1 // pred_region
      %s910 = ssub.s32 2048, 2048
      %911 = vsyncadd [#allocation4], %s910
      %s912 = sshll.u32 [#allocation8], 4
      %s913 = int_to_ptr.vmem [resolvable:$true] %s912
      %918 = dma.vmem_to_hbm [thread:$0]  %s913, 2048, %s3, [#allocation4], 128, 128, 8
    $region29: #{tpu_custom_call.1} parent=1 // pred_fallthru
      _
    // Predicated region
    $region30: #{tpu_custom_call.1} parent=1 // pred_check
      _
    $region31: #{tpu_custom_call.1} parent=1 // pred_check_branch
      %920 = sbr.rel (0) target = $region33
    $region32: #{tpu_custom_call.1} parent=1 // pred_region
      %921 = dma.done [#allocation4], 2048
    $region33: #{tpu_custom_call.1} parent=1 // pred_fallthru
      _
    %922 = vsyncpa [#allocation3], 1
    %923 = vsyncpa [#allocation6], 1
    %924 = vsyncpa [#allocation4], 1

</llo_original>
